<compile_context>
chip_gen: v7x
topology: tpu7x:2x2x1
jax: 0.10.0
libtpu: 0.0.40
codegen_flags: <defaults>
</compile_context>

<pallas_src>
import jax
import jax.numpy as jnp
from jax.experimental import pallas as pl
from jax.experimental.pallas import tpu as pltpu


def _round_up(n, m):
    return ((n + m - 1) // m) * m


def mlp_kernel(x_ref, w1_ref, b1_ref, w2_ref, b2_ref, o_ref):
    # x_ref: (tb, in_dim) bf16, w1_ref: (in_dim, hidden) bf16, b1_ref: (1, hidden) f32
    # w2_ref: (hidden, out_pad) bf16, b2_ref: (1, out_pad) f32, o_ref: (tb, out_pad) f32
    h = jnp.dot(x_ref[...], w1_ref[...], preferred_element_type=jnp.float32)
    h = jnp.maximum(h + b1_ref[...], 0.0)          # bias + ReLU in f32 (VPU)
    # Dropout (p=0.2): identity in eval mode.
    h = h.astype(w2_ref.dtype)                     # bf16 feed for second MXU matmul
    y = jnp.dot(h, w2_ref[...], preferred_element_type=jnp.float32)
    o_ref[...] = (y + b2_ref[...]).astype(o_ref.dtype)


def mlp_forward(x, w1, b1, w2, b2, *, block_b=128, compute_dtype=jnp.bfloat16):
    B, in_dim = x.shape
    hidden = w1.shape[1]
    out_dim = w2.shape[1]

    # bf16 needs >=16 sublanes per tile; don't over-pad tiny batches, but use a
    # big (MXU-filling) tile for realistic batch sizes.
    block_b = max(16, min(block_b, _round_up(B, 16)))
    B_pad = _round_up(B, block_b)
    out_pad = _round_up(out_dim, 128)              # lane-dense output stores

    x_p = jnp.pad(x, ((0, B_pad - B), (0, 0))) if B_pad != B else x
    b1_p = b1.reshape(1, hidden)
    w2_p = w2
    b2_p = b2.reshape(1, out_dim)
    if out_pad != out_dim:
        w2_p = jnp.pad(w2_p, ((0, 0), (0, out_pad - out_dim)))
        b2_p = jnp.pad(b2_p, ((0, 0), (0, out_pad - out_dim)))

    # bf16 matmul inputs (MXU peak path); biases stay f32 for the epilogue.
    x_c = x_p.astype(compute_dtype)
    w1_c = w1.astype(compute_dtype)
    w2_c = w2_p.astype(compute_dtype)
    b1_f = b1_p.astype(jnp.float32)
    b2_f = b2_p.astype(jnp.float32)

    grid = (B_pad // block_b,)
    flops = 2 * B_pad * in_dim * hidden + 2 * B_pad * hidden * out_pad
    bytes_accessed = (
        x_c.size * x_c.dtype.itemsize
        + w1_c.size * w1_c.dtype.itemsize
        + w2_c.size * w2_c.dtype.itemsize
        + b1_f.size * 4 + b2_f.size * 4
        + B_pad * out_pad * 4
    )

    out = pl.pallas_call(
        mlp_kernel,
        out_shape=jax.ShapeDtypeStruct((B_pad, out_pad), jnp.float32),
        grid=grid,
        in_specs=[
            pl.BlockSpec((block_b, in_dim), lambda i: (i, 0)),          # x tile
            pl.BlockSpec((in_dim, hidden), lambda i: (0, 0),
                         pipeline_mode=pl.Buffered(1)),                 # W1 (resident)
            pl.BlockSpec((1, hidden), lambda i: (0, 0),
                         pipeline_mode=pl.Buffered(1)),                 # b1
            pl.BlockSpec((hidden, out_pad), lambda i: (0, 0),
                         pipeline_mode=pl.Buffered(1)),                 # W2 (resident)
            pl.BlockSpec((1, out_pad), lambda i: (0, 0),
                         pipeline_mode=pl.Buffered(1)),                 # b2
        ],
        out_specs=pl.BlockSpec((block_b, out_pad), lambda i: (i, 0)),
        compiler_params=pltpu.CompilerParams(
            dimension_semantics=("parallel",),
        ),
        cost_estimate=pl.CostEstimate(
            flops=flops, transcendentals=0, bytes_accessed=bytes_accessed),
    )(x_c, w1_c, b1_f, w2_c, b2_f)

    return out[:B, :out_dim]


def init_params(key, in_dim, hidden_dim, out_dim, dtype=jnp.float32):
    # Mimic PyTorch nn.Linear default init: U(-1/sqrt(fan_in), 1/sqrt(fan_in)).
    k1, k2, k3, k4 = jax.random.split(key, 4)
    bound1 = 1.0 / (in_dim ** 0.5)
    bound2 = 1.0 / (hidden_dim ** 0.5)
    w1 = jax.random.uniform(k1, (in_dim, hidden_dim), dtype, -bound1, bound1)
    b1 = jax.random.uniform(k2, (1, hidden_dim), dtype, -bound1, bound1)
    w2 = jax.random.uniform(k3, (hidden_dim, out_dim), dtype, -bound2, bound2)
    b2 = jax.random.uniform(k4, (1, out_dim), dtype, -bound2, bound2)
    return w1, b1, w2, b2


if __name__ == "__main__":
    key = jax.random.PRNGKey(0)
    kx, kp = jax.random.split(key)

    B, in_dim, hidden_dim, out_dim = 8, 32, 64, 16
    x = jax.random.normal(kx, (B, in_dim), jnp.float32)
    w1, b1, w2, b2 = init_params(kp, in_dim, hidden_dim, out_dim)

    out = mlp_forward(x, w1, b1, w2, b2)
    out = jax.block_until_ready(out)

    # Reference in plain JAX, matching the kernel's bf16-input / f32-accumulate
    # path (eval-mode dropout = identity).
    xb, w1b, w2b = (a.astype(jnp.bfloat16) for a in (x, w1, w2))
    h_ref = jnp.maximum(
        jnp.dot(xb, w1b, preferred_element_type=jnp.float32) + b1, 0.0)
    ref = jnp.dot(h_ref.astype(jnp.bfloat16), w2b,
                  preferred_element_type=jnp.float32) + b2

    assert out.shape == (B, out_dim)
    assert jnp.allclose(out, ref, atol=2e-3, rtol=2e-3)

    print("KERNEL_OK")
</pallas_src>

<mosaic_0001>
module attributes {stable_mosaic.version = 11 : i64} {
  func.func @mlp_kernel(%arg0: i32, %arg1: memref<16x32xbf16, #tpu.memory_space<vmem>>, %arg2: memref<32x64xbf16, #tpu.memory_space<vmem>>, %arg3: memref<1x64xf32, #tpu.memory_space<vmem>>, %arg4: memref<64x128xbf16, #tpu.memory_space<vmem>>, %arg5: memref<1x128xf32, #tpu.memory_space<vmem>>, %arg6: memref<16x128xf32, #tpu.memory_space<vmem>>) attributes {dimension_semantics = [#tpu.dimension_semantics<parallel>], iteration_bounds = array<i64: 1>, scalar_prefetch = 0 : i64, scratch_operands = 0 : i64, tpu.core_type = #tpu.core_type<tc>, window_params = [{transform_indices = @transform_0, window_bounds = array<i64: 16, 32>}, {pipeline_mode = #tpu.pipeline_mode<synchronous>, transform_indices = @transform_1, window_bounds = array<i64: 32, 64>}, {pipeline_mode = #tpu.pipeline_mode<synchronous>, transform_indices = @transform_2, window_bounds = array<i64: 1, 64>}, {pipeline_mode = #tpu.pipeline_mode<synchronous>, transform_indices = @transform_3, window_bounds = array<i64: 64, 128>}, {pipeline_mode = #tpu.pipeline_mode<synchronous>, transform_indices = @transform_4, window_bounds = array<i64: 1, 128>}, {transform_indices = @transform_5, window_bounds = array<i64: 16, 128>}]} {
    %c0 = arith.constant 0 : index
    %c0_0 = arith.constant 0 : index
    %0 = vector.load %arg1[%c0, %c0_0] : memref<16x32xbf16, #tpu.memory_space<vmem>>, vector<16x32xbf16>
    %c0_1 = arith.constant 0 : index
    %c0_2 = arith.constant 0 : index
    %1 = vector.load %arg2[%c0_1, %c0_2] : memref<32x64xbf16, #tpu.memory_space<vmem>>, vector<32x64xbf16>
    %cst = arith.constant dense<0.000000e+00> : vector<16x64xf32>
    %2 = tpu.matmul %0, %1, %cst {dimension_numbers = #tpu.dot_dimension_numbers<[1], [0], [0], [1], [0, 0, 1, 1], [], []>} : vector<16x32xbf16>, vector<32x64xbf16>, vector<16x64xf32> -> vector<16x64xf32>
    %c0_3 = arith.constant 0 : index
    %c0_4 = arith.constant 0 : index
    %3 = vector.load %arg3[%c0_3, %c0_4] : memref<1x64xf32, #tpu.memory_space<vmem>>, vector<1x64xf32>
    %4 = vector.broadcast %3 : vector<1x64xf32> to vector<16x64xf32>
    %5 = arith.addf %2, %4 : vector<16x64xf32>
    %cst_5 = arith.constant 0.000000e+00 : f32
    %6 = vector.broadcast %cst_5 : f32 to vector<16x64xf32>
    %7 = arith.maximumf %5, %6 : vector<16x64xf32>
    %8 = arith.truncf %7 : vector<16x64xf32> to vector<16x64xbf16>
    %c0_6 = arith.constant 0 : index
    %c0_7 = arith.constant 0 : index
    %9 = vector.load %arg4[%c0_6, %c0_7] : memref<64x128xbf16, #tpu.memory_space<vmem>>, vector<64x128xbf16>
    %cst_8 = arith.constant dense<0.000000e+00> : vector<16x128xf32>
    %10 = tpu.matmul %8, %9, %cst_8 {dimension_numbers = #tpu.dot_dimension_numbers<[1], [0], [0], [1], [0, 0, 1, 1], [], []>} : vector<16x64xbf16>, vector<64x128xbf16>, vector<16x128xf32> -> vector<16x128xf32>
    %c0_9 = arith.constant 0 : index
    %c0_10 = arith.constant 0 : index
    %11 = vector.load %arg5[%c0_9, %c0_10] : memref<1x128xf32, #tpu.memory_space<vmem>>, vector<1x128xf32>
    %12 = vector.broadcast %11 : vector<1x128xf32> to vector<16x128xf32>
    %13 = arith.addf %10, %12 : vector<16x128xf32>
    %c0_11 = arith.constant 0 : index
    %c0_12 = arith.constant 0 : index
    %14 = vector.load %arg6[%c0_11, %c0_12] : memref<16x128xf32, #tpu.memory_space<vmem>>, vector<16x128xf32>
    tpu.vector_store %arg6[%c0_11, %c0_12], %13 {strides = array<i32>} : memref<16x128xf32, #tpu.memory_space<vmem>>, vector<16x128xf32>,
    return
  }
  func.func @transform_0(%arg0: i32) -> (i32, i32) {
    %c0_i32 = arith.constant 0 : i32
    %c0_i32_0 = arith.constant 0 : i32
    return %arg0, %c0_i32 : i32, i32
  }
  func.func @transform_1(%arg0: i32) -> (i32, i32) {
    %c0_i32 = arith.constant 0 : i32
    %c0_i32_0 = arith.constant 0 : i32
    %c0_i32_1 = arith.constant 0 : i32
    return %c0_i32, %c0_i32_0 : i32, i32
  }
  func.func @transform_2(%arg0: i32) -> (i32, i32) {
    %c0_i32 = arith.constant 0 : i32
    %c0_i32_0 = arith.constant 0 : i32
    %c0_i32_1 = arith.constant 0 : i32
    return %c0_i32, %c0_i32_0 : i32, i32
  }
  func.func @transform_3(%arg0: i32) -> (i32, i32) {
    %c0_i32 = arith.constant 0 : i32
    %c0_i32_0 = arith.constant 0 : i32
    %c0_i32_1 = arith.constant 0 : i32
    return %c0_i32, %c0_i32_0 : i32, i32
  }
  func.func @transform_4(%arg0: i32) -> (i32, i32) {
    %c0_i32 = arith.constant 0 : i32
    %c0_i32_0 = arith.constant 0 : i32
    %c0_i32_1 = arith.constant 0 : i32
    return %c0_i32, %c0_i32_0 : i32, i32
  }
  func.func @transform_5(%arg0: i32) -> (i32, i32) {
    %c0_i32 = arith.constant 0 : i32
    %c0_i32_0 = arith.constant 0 : i32
    return %arg0, %c0_i32 : i32, i32
  }
}

</mosaic_0001>

<llo_original>
// kernel: tpu_custom_call.1
$region0: #{tpu_custom_call.1}
  #allocation0 [shape = 'u32[]', space=smem, size = 0x4, offset = 0x4, fixed_abs, tag = 'smem constant byte address 0x4 - core index']
  #allocation1 [shape = 'u32[144,128]{1,0:T(1,128)}', space=vmem, size = 0x12000, scoped, tag = 'internal scratch']
  %s0 = inlined_call_operand.hbm [shape: bf16[16,32], index: 0, kind: input, shape index: {}]
  %s1 = inlined_call_operand.hbm [shape: bf16[32,64], index: 1, kind: input, shape index: {}]
  %s2 = inlined_call_operand.vmem [shape: f32[1,64], index: 2, kind: input, shape index: {}]
  %s3 = inlined_call_operand.hbm [shape: bf16[64,128], index: 3, kind: input, shape index: {}]
  %s4 = inlined_call_operand.vmem [shape: f32[1,128], index: 4, kind: input, shape index: {}]
  %s5 = inlined_call_operand.hbm [shape: f32[16,128], index: 5, kind: output, shape index: {}]
  %s6 = sld [smem:[#allocation0]]
  $region42: #{tpu_custom_call.1} parent=0
    _
  %s8 = ssub.s32 1, %s6
  %s9 = scalar_select 0, %s8, %s6
  $region1: #{tpu_custom_call.1} parent=0
    #allocation2 [shape = 'u8[4096]{0}', space=vmem, size = 0x1000, scoped, tag = 'input window, operand 0, single buffered']
    #allocation3 [shape = 's32[1]{0}', space=sflag, size = 0x4, scoped, tag = 'scoped memory for tpu_custom_call.1']
    #allocation4 [shape = 's32[1]{0}', space=sflag, size = 0x4, scoped, tag = 'scoped memory for tpu_custom_call.1']
    #allocation5 [shape = 'u8[8192]{0}', space=vmem, size = 0x2000, scoped, tag = 'input window, operand 1, single buffered']
    #allocation6 [shape = 's32[1]{0}', space=sflag, size = 0x4, scoped, tag = 'scoped memory for tpu_custom_call.1']
    #allocation7 [shape = 'u8[16384]{0}', space=vmem, size = 0x4000, scoped, tag = 'input window, operand 3, single buffered']
    #allocation8 [shape = 'u8[8192]{0}', space=vmem, size = 0x2000, scoped, tag = 'output window, operand 0, single buffered']
    %10 = vsyncpa [#allocation3], 0
    %11 = vsyncpa [#allocation6], 0
    %12 = vsyncpa [#allocation4], 0
    // Predicated region
    $region2: #{tpu_custom_call.1} parent=1 // pred_check
      _
    $region3: #{tpu_custom_call.1} parent=1 // pred_check_branch
      %14 = sbr.rel (0) target = $region5
    $region4: #{tpu_custom_call.1} parent=1 // pred_region
      %s16 = ssub.s32 128, 128
      %17 = vsyncadd [#allocation3], %s16
      %s18 = sshll.u32 [#allocation2], 4
      %s19 = int_to_ptr.vmem [resolvable:$true] %s18
      %24 = dma.hbm_to_vmem [thread:$0]  %s0, 128, %s19, [#allocation3], 64, 64, 4
    $region5: #{tpu_custom_call.1} parent=1 // pred_fallthru
      _
    // Predicated region
    $region6: #{tpu_custom_call.1} parent=1 // pred_check
      _
    $region7: #{tpu_custom_call.1} parent=1 // pred_check_branch
      %26 = sbr.rel (0) target = $region9
    $region8: #{tpu_custom_call.1} parent=1 // pred_region
      %s28 = ssub.s32 256, 256
      %29 = vsyncadd [#allocation6], %s28
      %s30 = sshll.u32 [#allocation5], 4
      %s31 = int_to_ptr.vmem [resolvable:$true] %s30
      %36 = dma.hbm_to_vmem [thread:$0]  %s1, 256, %s31, [#allocation6], 64, 64, 4
    $region9: #{tpu_custom_call.1} parent=1 // pred_fallthru
      _
    // Predicated region
    $region10: #{tpu_custom_call.1} parent=1 // pred_check
      _
    $region11: #{tpu_custom_call.1} parent=1 // pred_check_branch
      %38 = sbr.rel (0) target = $region13
    $region12: #{tpu_custom_call.1} parent=1 // pred_region
      _
    $region13: #{tpu_custom_call.1} parent=1 // pred_fallthru
      _
    // Predicated region
    $region14: #{tpu_custom_call.1} parent=1 // pred_check
      _
    $region15: #{tpu_custom_call.1} parent=1 // pred_check_branch
      %40 = sbr.rel (0) target = $region17
    $region16: #{tpu_custom_call.1} parent=1 // pred_region
      %s42 = ssub.s32 512, 512
      %43 = vsyncadd [#allocation6], %s42
      %s44 = sshll.u32 [#allocation7], 4
      %s45 = int_to_ptr.vmem [resolvable:$true] %s44
      %50 = dma.hbm_to_vmem [thread:$0]  %s3, 512, %s45, [#allocation6], 64, 64, 4
    $region17: #{tpu_custom_call.1} parent=1 // pred_fallthru
      _
    // Predicated region
    $region18: #{tpu_custom_call.1} parent=1 // pred_check
      _
    $region19: #{tpu_custom_call.1} parent=1 // pred_check_branch
      %52 = sbr.rel (0) target = $region21
    $region20: #{tpu_custom_call.1} parent=1 // pred_region
      _
    $region21: #{tpu_custom_call.1} parent=1 // pred_fallthru
      _
    // Predicated region
    $region22: #{tpu_custom_call.1} parent=1 // pred_check
      _
    $region23: #{tpu_custom_call.1} parent=1 // pred_check_branch
      %54 = sbr.rel (0) target = $region25
    $region24: #{tpu_custom_call.1} parent=1 // pred_region
      %55 = dma.done [#allocation3], 128
    $region25: #{tpu_custom_call.1} parent=1 // pred_fallthru
      _
    // Predicated region
    $region26: #{tpu_custom_call.1} parent=1 // pred_check
      _
    $region27: #{tpu_custom_call.1} parent=1 // pred_check_branch
      %57 = sbr.rel (0) target = $region29
    $region28: #{tpu_custom_call.1} parent=1 // pred_region
      %58 = dma.done [#allocation6], 256
    $region29: #{tpu_custom_call.1} parent=1 // pred_fallthru
      _
    // Predicated region
    $region30: #{tpu_custom_call.1} parent=1 // pred_check
      _
    $region31: #{tpu_custom_call.1} parent=1 // pred_check_branch
      %60 = sbr.rel (0) target = $region33
    $region32: #{tpu_custom_call.1} parent=1 // pred_region
      %61 = dma.done [#allocation6], 512
    $region33: #{tpu_custom_call.1} parent=1 // pred_fallthru
      _
    %v63 = vld [vmem:[#allocation2] sm:$0xf]
    %v64 = vld [vmem:[#allocation2 + $0x4] sm:$0xf]
    %v65 = vld [vmem:[#allocation5] sm:$0xf]
    %v66 = vld [vmem:[#allocation5 + $0x4] sm:$0xf]
    %v67 = vld [vmem:[#allocation5 + $0x8] sm:$0xf]
    %v68 = vld [vmem:[#allocation5 + $0xc] sm:$0xf]
    %v69 = vld [vmem:[%s2] sm:$0x1]
    %v71 = vlaneseq
    %v72 = vshrl.u32 %v71, 7
    %v73 = vsub.s32 0, %v72
    %v74 = vrot.slane %v69, %v73
    %v78 = vunpack.c.l.b16 %v63
    %v79 = vunpack.c.l.b16 %v64
    %v80 = vpack.c.b16 %v79, %v78
    %v85 = vunpack.c.l.b16 %v65
    %v86 = vunpack.c.l.b16 %v66
    %v87 = vunpack.c.l.b16 %v67
    %v88 = vunpack.c.l.b16 %v68
    %v89 = vpack.c.b16 %v86, %v85
    %v90 = vpack.c.b16 %v88, %v87
    %vm93 = vcmask 261120
    %v95 = vsel %vm93, %v80, 0
    %97 = vmatprep.subr.bf16.mxu0 0
    %98 = vmatpush1.bf16.msra.mxu0 %v89
    %99 = vmatprep.subr.bf16.mxu0 0
    %100 = vmatpush1.bf16.msra.mxu0 %v90
    %101 = vmatprep.subr.bf16.mxu0 0
    %102 = vmatpush1.bf16.msra.mxu0 0
    %103 = vmatprep.subr.bf16.mxu0 0
    %104 = vmatpush1.bf16.msra.mxu0 0
    %105 = vmatprep.subr.bf16.mxu0 0
    %106 = vmatpush1.bf16.msra.mxu0 0
    %107 = vmatprep.subr.bf16.mxu0 0
    %108 = vmatpush1.bf16.msra.mxu0 0
    %109 = vmatprep.subr.bf16.mxu0 0
    %110 = vmatpush1.bf16.msra.mxu0 0
    %111 = vmatprep.subr.bf16.mxu0 0
    %112 = vmatpush1.bf16.msra.mxu0 0
    %113 = vmatprep.subr.bf16.mxu0 0
    %114 = vmatpush1.bf16.msra.mxu0 0
    %115 = vmatprep.subr.bf16.mxu0 0
    %116 = vmatpush1.bf16.msra.mxu0 0
    %117 = vmatprep.subr.bf16.mxu0 0
    %118 = vmatpush1.bf16.msra.mxu0 0
    %119 = vmatprep.subr.bf16.mxu0 0
    %120 = vmatpush1.bf16.msra.mxu0 0
    %121 = vmatprep.subr.bf16.mxu0 0
    %122 = vmatpush1.bf16.msra.mxu0 0
    %123 = vmatprep.subr.bf16.mxu0 0
    %124 = vmatpush1.bf16.msra.mxu0 0
    %125 = vmatprep.subr.bf16.mxu0 0
    %126 = vmatpush1.bf16.msra.mxu0 0
    %127 = vmatprep.subr.bf16.mxu0 0
    %128 = vmatpush1.bf16.msra.mxu0 0
    %129 = vmatprep.mubr.bf16.mxu0 0
    %130 = vmatmul.mubr.bf16.gmra.mrb[0].mxu0 %v95
    %v131 = vpop.f32.mrb[0].mxu0
    %v132 = vadd.f32 %v74, %v131
    %v133 = vpop.f32.mrb[0].mxu0
    %v134 = vpop.f32.mrb[0].mxu0
    %v135 = vadd.f32 %v74, %v134
    %v136 = vpop.f32.mrb[0].mxu0
    %137 = vdwg.mxu0
    %v138 = vmax.f32 %v132, 0.0
    %v139 = vmax.f32 %v135, 0.0
    %v140 = vpack.c.bf16 %v139, %v138
    %v141 = vld [vmem:[#allocation7] sm:$0xf]
    %v142 = vld [vmem:[#allocation7 + $0x4] sm:$0xf]
    %v143 = vld [vmem:[#allocation7 + $0x8] sm:$0xf]
    %v144 = vld [vmem:[#allocation7 + $0xc] sm:$0xf]
    %v145 = vld [vmem:[#allocation7 + $0x10] sm:$0xf]
    %v146 = vld [vmem:[#allocation7 + $0x14] sm:$0xf]
    %v147 = vld [vmem:[#allocation7 + $0x18] sm:$0xf]
    %v148 = vld [vmem:[#allocation7 + $0x1c] sm:$0xf]
    %v149 = vld [vmem:[%s4] sm:$0x1]
    %v151 = vlaneseq
    %v152 = vshrl.u32 %v151, 7
    %v153 = vsub.s32 0, %v152
    %v154 = vrot.slane %v149, %v153
    %v164 = vunpack.c.l.b16 %v141
    %v165 = vunpack.c.l.b16 %v142
    %v166 = vunpack.c.l.b16 %v143
    %v167 = vunpack.c.l.b16 %v144
    %v168 = vunpack.c.l.b16 %v145
    %v169 = vunpack.c.l.b16 %v146
    %v170 = vunpack.c.l.b16 %v147
    %v171 = vunpack.c.l.b16 %v148
    %v172 = vpack.c.b16 %v165, %v164
    %v173 = vpack.c.b16 %v167, %v166
    %v174 = vpack.c.b16 %v169, %v168
    %v175 = vpack.c.b16 %v171, %v170
    %vm180 = vcmask 523264
    %v182 = vsel %vm180, %v140, 0
    %184 = vmatprep.subr.bf16.mxu0 0
    %185 = vmatpush1.bf16.msra.mxu0 %v172
    %186 = vmatprep.subr.bf16.mxu0 0
    %187 = vmatpush1.bf16.msra.mxu0 %v173
    %188 = vmatprep.subr.bf16.mxu0 0
    %189 = vmatpush1.bf16.msra.mxu0 %v174
    %190 = vmatprep.subr.bf16.mxu0 0
    %191 = vmatpush1.bf16.msra.mxu0 %v175
    %192 = vmatprep.subr.bf16.mxu0 0
    %193 = vmatpush1.bf16.msra.mxu0 0
    %194 = vmatprep.subr.bf16.mxu0 0
    %195 = vmatpush1.bf16.msra.mxu0 0
    %196 = vmatprep.subr.bf16.mxu0 0
    %197 = vmatpush1.bf16.msra.mxu0 0
    %198 = vmatprep.subr.bf16.mxu0 0
    %199 = vmatpush1.bf16.msra.mxu0 0
    %200 = vmatprep.subr.bf16.mxu0 0
    %201 = vmatpush1.bf16.msra.mxu0 0
    %202 = vmatprep.subr.bf16.mxu0 0
    %203 = vmatpush1.bf16.msra.mxu0 0
    %204 = vmatprep.subr.bf16.mxu0 0
    %205 = vmatpush1.bf16.msra.mxu0 0
    %206 = vmatprep.subr.bf16.mxu0 0
    %207 = vmatpush1.bf16.msra.mxu0 0
    %208 = vmatprep.subr.bf16.mxu0 0
    %209 = vmatpush1.bf16.msra.mxu0 0
    %210 = vmatprep.subr.bf16.mxu0 0
    %211 = vmatpush1.bf16.msra.mxu0 0
    %212 = vmatprep.subr.bf16.mxu0 0
    %213 = vmatpush1.bf16.msra.mxu0 0
    %214 = vmatprep.subr.bf16.mxu0 0
    %215 = vmatpush1.bf16.msra.mxu0 0
    %216 = vmatprep.mubr.bf16.mxu0 0
    %217 = vmatmul.mubr.bf16.gmra.mrb[0].mxu0 %v182
    %v218 = vpop.f32.mrb[0].mxu0
    %v219 = vadd.f32 %v154, %v218
    %v220 = vpop.f32.mrb[0].mxu0
    %v221 = vpop.f32.mrb[0].mxu0
    %v222 = vadd.f32 %v154, %v221
    %v223 = vpop.f32.mrb[0].mxu0
    %224 = vdwg.mxu0
    %225 = vst [vmem:[#allocation8] sm:$0xff] %v219
    %226 = vst [vmem:[#allocation8 + $0x8] sm:$0xff] %v222
    // Predicated region
    $region34: #{tpu_custom_call.1} parent=1 // pred_check
      _
    $region35: #{tpu_custom_call.1} parent=1 // pred_check_branch
      %228 = sbr.rel (0) target = $region37
    $region36: #{tpu_custom_call.1} parent=1 // pred_region
      %s230 = ssub.s32 256, 256
      %231 = vsyncadd [#allocation4], %s230
      %s232 = sshll.u32 [#allocation8], 4
      %s233 = int_to_ptr.vmem [resolvable:$true] %s232
      %238 = dma.vmem_to_hbm [thread:$0]  %s233, 256, %s5, [#allocation4], 128, 128, 8
    $region37: #{tpu_custom_call.1} parent=1 // pred_fallthru
      _
    // Predicated region
    $region38: #{tpu_custom_call.1} parent=1 // pred_check
      _
    $region39: #{tpu_custom_call.1} parent=1 // pred_check_branch
      %240 = sbr.rel (0) target = $region41
    $region40: #{tpu_custom_call.1} parent=1 // pred_region
      %241 = dma.done [#allocation4], 256
    $region41: #{tpu_custom_call.1} parent=1 // pred_fallthru
      _
    %242 = vsyncpa [#allocation3], 1
    %243 = vsyncpa [#allocation6], 1
    %244 = vsyncpa [#allocation4], 1

</llo_original>
